<compile_context>
chip_gen: v6e
topology: v6e:2x2x1
jax: 0.10.0
libtpu: 0.0.40
codegen_flags: <defaults>
</compile_context>

<pallas_src>
import jax
import jax.numpy as jnp
from jax.experimental import pallas as pl
from jax.experimental.pallas import tpu as pltpu

LANE = 128      # vreg lane width
SUBLANE = 8     # f32 sublane count


def _round_up(n, m):
    return ((n + m - 1) // m) * m


def dqn_kernel(x_ref,
               w1_ref, b1_ref,
               w2_ref, b2_ref,
               w3_ref, b3_ref,
               w4_ref, b4_ref,
               w5_ref, b5_ref,
               o_ref):
    # Five MXU matmuls with f32 accumulation; bias+ReLU on the VPU.
    h = x_ref[...]
    h = jnp.maximum(jnp.dot(h, w1_ref[...], preferred_element_type=jnp.float32) + b1_ref[...], 0.0)
    h = jnp.maximum(jnp.dot(h, w2_ref[...], preferred_element_type=jnp.float32) + b2_ref[...], 0.0)
    h = jnp.maximum(jnp.dot(h, w3_ref[...], preferred_element_type=jnp.float32) + b3_ref[...], 0.0)
    h = jnp.maximum(jnp.dot(h, w4_ref[...], preferred_element_type=jnp.float32) + b4_ref[...], 0.0)
    h = jnp.dot(h, w5_ref[...], preferred_element_type=jnp.float32) + b5_ref[...]
    o_ref[...] = h.astype(o_ref.dtype)


def prepare_params(params):
    """One-time (init-time) weight preparation.

    Pads hidden output dims to the 128-lane width (48/96 -> 128) so layers 2-4
    are single aligned MXU tiles.  The first layer keeps its real K=16 input
    dim (matches the unpadded activations) and the last layer keeps its real
    4-wide output (no output-lane padding, no wrapper slice needed).
    Zero-padded rows/columns contribute exactly 0 through matmul+bias+ReLU.
    """
    prepared = []
    n = len(params)
    in_dim = params[0][0].shape[0]            # real input features (16)
    for idx, (w, b) in enumerate(params):
        fi, fo = w.shape
        fop = fo if idx == n - 1 else _round_up(fo, LANE)   # keep last layer's 4
        wp = jnp.zeros((in_dim, fop), jnp.float32).at[:fi, :fo].set(w.astype(jnp.float32))
        bp = jnp.zeros((1, fop), jnp.float32).at[:, :fo].set(
            b.reshape(1, fo).astype(jnp.float32))
        prepared.append((wp, bp))
        in_dim = fop                           # next layer's (padded) K
    return prepared


def dqn_forward(x, prepared_params, *, batch_tile=1024):
    """x: (B, 16) f32.  prepared_params: output of prepare_params()."""
    B, F = x.shape
    out_dim = prepared_params[-1][0].shape[1]  # 4 (unpadded)

    # Batch tile: sublane-aligned.  Aim for >= 2 grid steps at moderate batch
    # so the "parallel" axis can use both v7x TensorCores; cap at batch_tile
    # so very large batches stream in VMEM-friendly chunks.  The last tile may
    # be ragged (B need not be a multiple of Bt) - Pallas masks it.
    Bt = max(SUBLANE, min(batch_tile, _round_up(pl.cdiv(B, 2), SUBLANE)))
    grid = (pl.cdiv(B, Bt),)

    # Activation tile streams over the batch grid axis; weights/biases use a
    # constant block index, so they are fetched once and stay VMEM-resident.
    in_specs = [pl.BlockSpec((Bt, F), lambda i: (i, 0))]
    flat = []
    for (w, b) in prepared_params:
        flat.extend([w, b])
        in_specs.append(pl.BlockSpec(w.shape, lambda i: (0, 0)))
        in_specs.append(pl.BlockSpec(b.shape, lambda i: (0, 0)))

    return pl.pallas_call(
        dqn_kernel,
        out_shape=jax.ShapeDtypeStruct((B, out_dim), jnp.float32),
        grid=grid,
        in_specs=in_specs,
        out_specs=pl.BlockSpec((Bt, out_dim), lambda i: (i, 0)),
        compiler_params=pltpu.CompilerParams(
            # Shard batch tiles across TensorCores on v7x; harmless on v5e/v6e.
            dimension_semantics=("parallel",),
            # Default scoped VMEM limit is ample (~few MB footprint at Bt=1024).
        ),
    )(x.astype(jnp.float32), *flat)


def init_params(key):
    """Deterministic init mimicking PyTorch nn.Linear default (U[-1/sqrt(fan_in), +])."""
    dims = [(16, 48), (48, 48), (48, 96), (96, 96), (96, 4)]
    params = []
    for (fan_in, fan_out) in dims:
        key, kw, kb = jax.random.split(key, 3)
        bound = 1.0 / (fan_in ** 0.5)
        w = jax.random.uniform(kw, (fan_in, fan_out), jnp.float32, -bound, bound)
        b = jax.random.uniform(kb, (1, fan_out), jnp.float32, -bound, bound)
        params.append((w, b))
    return params


def reference_forward(x, params):
    h = x
    for i, (w, b) in enumerate(params):
        h = h @ w + b
        if i < len(params) - 1:
            h = jnp.maximum(h, 0.0)
    return h


if __name__ == "__main__":
    key = jax.random.PRNGKey(0)
    kp, kx = jax.random.split(key)
    params = init_params(kp)

    # Hoisted out of the forward path: pad/transform weights exactly once.
    prepared = prepare_params(params)

    batch = 8
    x = jax.random.normal(kx, (batch, 16), jnp.float32)

    out = dqn_forward(x, prepared)
    out = jax.block_until_ready(out)

    ref = reference_forward(x, params)
    assert out.shape == (batch, 4), out.shape
    assert jnp.allclose(out, ref, atol=1e-4, rtol=1e-4), "mismatch vs reference"
    print("KERNEL_OK")
</pallas_src>

<mosaic_0001>
module attributes {stable_mosaic.version = 11 : i64} {
  func.func @dqn_kernel(%arg0: i32, %arg1: memref<8x16xf32, #tpu.memory_space<vmem>>, %arg2: memref<16x128xf32, #tpu.memory_space<vmem>>, %arg3: memref<1x128xf32, #tpu.memory_space<vmem>>, %arg4: memref<128x128xf32, #tpu.memory_space<vmem>>, %arg5: memref<1x128xf32, #tpu.memory_space<vmem>>, %arg6: memref<128x128xf32, #tpu.memory_space<vmem>>, %arg7: memref<1x128xf32, #tpu.memory_space<vmem>>, %arg8: memref<128x128xf32, #tpu.memory_space<vmem>>, %arg9: memref<1x128xf32, #tpu.memory_space<vmem>>, %arg10: memref<128x4xf32, #tpu.memory_space<vmem>>, %arg11: memref<1x4xf32, #tpu.memory_space<vmem>>, %arg12: memref<8x4xf32, #tpu.memory_space<vmem>>) attributes {dimension_semantics = [#tpu.dimension_semantics<parallel>], iteration_bounds = array<i64: 1>, scalar_prefetch = 0 : i64, scratch_operands = 0 : i64, tpu.core_type = #tpu.core_type<tc>, window_params = [{transform_indices = @transform_0, window_bounds = array<i64: 8, 16>}, {pipeline_mode = #tpu.pipeline_mode<synchronous>, transform_indices = @transform_1, window_bounds = array<i64: 16, 128>}, {pipeline_mode = #tpu.pipeline_mode<synchronous>, transform_indices = @transform_2, window_bounds = array<i64: 1, 128>}, {pipeline_mode = #tpu.pipeline_mode<synchronous>, transform_indices = @transform_3, window_bounds = array<i64: 128, 128>}, {pipeline_mode = #tpu.pipeline_mode<synchronous>, transform_indices = @transform_4, window_bounds = array<i64: 1, 128>}, {pipeline_mode = #tpu.pipeline_mode<synchronous>, transform_indices = @transform_5, window_bounds = array<i64: 128, 128>}, {pipeline_mode = #tpu.pipeline_mode<synchronous>, transform_indices = @transform_6, window_bounds = array<i64: 1, 128>}, {pipeline_mode = #tpu.pipeline_mode<synchronous>, transform_indices = @transform_7, window_bounds = array<i64: 128, 128>}, {pipeline_mode = #tpu.pipeline_mode<synchronous>, transform_indices = @transform_8, window_bounds = array<i64: 1, 128>}, {pipeline_mode = #tpu.pipeline_mode<synchronous>, transform_indices = @transform_9, window_bounds = array<i64: 128, 4>}, {pipeline_mode = #tpu.pipeline_mode<synchronous>, transform_indices = @transform_10, window_bounds = array<i64: 1, 4>}, {transform_indices = @transform_11, window_bounds = array<i64: 8, 4>}]} {
    %c0 = arith.constant 0 : index
    %c0_0 = arith.constant 0 : index
    %0 = vector.load %arg1[%c0, %c0_0] : memref<8x16xf32, #tpu.memory_space<vmem>>, vector<8x16xf32>
    %c0_1 = arith.constant 0 : index
    %c0_2 = arith.constant 0 : index
    %1 = vector.load %arg2[%c0_1, %c0_2] : memref<16x128xf32, #tpu.memory_space<vmem>>, vector<16x128xf32>
    %cst = arith.constant dense<0.000000e+00> : vector<8x128xf32>
    %2 = tpu.matmul %0, %1, %cst {dimension_numbers = #tpu.dot_dimension_numbers<[1], [0], [0], [1], [0, 0, 1, 1], [], []>} : vector<8x16xf32>, vector<16x128xf32>, vector<8x128xf32> -> vector<8x128xf32>
    %c0_3 = arith.constant 0 : index
    %c0_4 = arith.constant 0 : index
    %3 = vector.load %arg3[%c0_3, %c0_4] : memref<1x128xf32, #tpu.memory_space<vmem>>, vector<1x128xf32>
    %4 = vector.broadcast %3 : vector<1x128xf32> to vector<8x128xf32>
    %5 = arith.addf %2, %4 : vector<8x128xf32>
    %cst_5 = arith.constant 0.000000e+00 : f32
    %6 = vector.broadcast %cst_5 : f32 to vector<8x128xf32>
    %7 = arith.maximumf %5, %6 : vector<8x128xf32>
    %c0_6 = arith.constant 0 : index
    %c0_7 = arith.constant 0 : index
    %8 = vector.load %arg4[%c0_6, %c0_7] : memref<128x128xf32, #tpu.memory_space<vmem>>, vector<128x128xf32>
    %cst_8 = arith.constant dense<0.000000e+00> : vector<8x128xf32>
    %9 = tpu.matmul %7, %8, %cst_8 {dimension_numbers = #tpu.dot_dimension_numbers<[1], [0], [0], [1], [0, 0, 1, 1], [], []>} : vector<8x128xf32>, vector<128x128xf32>, vector<8x128xf32> -> vector<8x128xf32>
    %c0_9 = arith.constant 0 : index
    %c0_10 = arith.constant 0 : index
    %10 = vector.load %arg5[%c0_9, %c0_10] : memref<1x128xf32, #tpu.memory_space<vmem>>, vector<1x128xf32>
    %11 = vector.broadcast %10 : vector<1x128xf32> to vector<8x128xf32>
    %12 = arith.addf %9, %11 : vector<8x128xf32>
    %cst_11 = arith.constant 0.000000e+00 : f32
    %13 = vector.broadcast %cst_11 : f32 to vector<8x128xf32>
    %14 = arith.maximumf %12, %13 : vector<8x128xf32>
    %c0_12 = arith.constant 0 : index
    %c0_13 = arith.constant 0 : index
    %15 = vector.load %arg6[%c0_12, %c0_13] : memref<128x128xf32, #tpu.memory_space<vmem>>, vector<128x128xf32>
    %cst_14 = arith.constant dense<0.000000e+00> : vector<8x128xf32>
    %16 = tpu.matmul %14, %15, %cst_14 {dimension_numbers = #tpu.dot_dimension_numbers<[1], [0], [0], [1], [0, 0, 1, 1], [], []>} : vector<8x128xf32>, vector<128x128xf32>, vector<8x128xf32> -> vector<8x128xf32>
    %c0_15 = arith.constant 0 : index
    %c0_16 = arith.constant 0 : index
    %17 = vector.load %arg7[%c0_15, %c0_16] : memref<1x128xf32, #tpu.memory_space<vmem>>, vector<1x128xf32>
    %18 = vector.broadcast %17 : vector<1x128xf32> to vector<8x128xf32>
    %19 = arith.addf %16, %18 : vector<8x128xf32>
    %cst_17 = arith.constant 0.000000e+00 : f32
    %20 = vector.broadcast %cst_17 : f32 to vector<8x128xf32>
    %21 = arith.maximumf %19, %20 : vector<8x128xf32>
    %c0_18 = arith.constant 0 : index
    %c0_19 = arith.constant 0 : index
    %22 = vector.load %arg8[%c0_18, %c0_19] : memref<128x128xf32, #tpu.memory_space<vmem>>, vector<128x128xf32>
    %cst_20 = arith.constant dense<0.000000e+00> : vector<8x128xf32>
    %23 = tpu.matmul %21, %22, %cst_20 {dimension_numbers = #tpu.dot_dimension_numbers<[1], [0], [0], [1], [0, 0, 1, 1], [], []>} : vector<8x128xf32>, vector<128x128xf32>, vector<8x128xf32> -> vector<8x128xf32>
    %c0_21 = arith.constant 0 : index
    %c0_22 = arith.constant 0 : index
    %24 = vector.load %arg9[%c0_21, %c0_22] : memref<1x128xf32, #tpu.memory_space<vmem>>, vector<1x128xf32>
    %25 = vector.broadcast %24 : vector<1x128xf32> to vector<8x128xf32>
    %26 = arith.addf %23, %25 : vector<8x128xf32>
    %cst_23 = arith.constant 0.000000e+00 : f32
    %27 = vector.broadcast %cst_23 : f32 to vector<8x128xf32>
    %28 = arith.maximumf %26, %27 : vector<8x128xf32>
    %c0_24 = arith.constant 0 : index
    %c0_25 = arith.constant 0 : index
    %29 = vector.load %arg10[%c0_24, %c0_25] : memref<128x4xf32, #tpu.memory_space<vmem>>, vector<128x4xf32>
    %cst_26 = arith.constant dense<0.000000e+00> : vector<8x4xf32>
    %30 = tpu.matmul %28, %29, %cst_26 {dimension_numbers = #tpu.dot_dimension_numbers<[1], [0], [0], [1], [0, 0, 1, 1], [], []>} : vector<8x128xf32>, vector<128x4xf32>, vector<8x4xf32> -> vector<8x4xf32>
    %c0_27 = arith.constant 0 : index
    %c0_28 = arith.constant 0 : index
    %31 = vector.load %arg11[%c0_27, %c0_28] : memref<1x4xf32, #tpu.memory_space<vmem>>, vector<1x4xf32>
    %32 = vector.broadcast %31 : vector<1x4xf32> to vector<8x4xf32>
    %33 = arith.addf %30, %32 : vector<8x4xf32>
    %c0_29 = arith.constant 0 : index
    %c0_30 = arith.constant 0 : index
    %34 = vector.load %arg12[%c0_29, %c0_30] : memref<8x4xf32, #tpu.memory_space<vmem>>, vector<8x4xf32>
    tpu.vector_store %arg12[%c0_29, %c0_30], %33 {strides = array<i32>} : memref<8x4xf32, #tpu.memory_space<vmem>>, vector<8x4xf32>,
    return
  }
  func.func @transform_0(%arg0: i32) -> (i32, i32) {
    %c0_i32 = arith.constant 0 : i32
    %c0_i32_0 = arith.constant 0 : i32
    return %arg0, %c0_i32 : i32, i32
  }
  func.func @transform_1(%arg0: i32) -> (i32, i32) {
    %c0_i32 = arith.constant 0 : i32
    %c0_i32_0 = arith.constant 0 : i32
    %c0_i32_1 = arith.constant 0 : i32
    return %c0_i32, %c0_i32_0 : i32, i32
  }
  func.func @transform_2(%arg0: i32) -> (i32, i32) {
    %c0_i32 = arith.constant 0 : i32
    %c0_i32_0 = arith.constant 0 : i32
    %c0_i32_1 = arith.constant 0 : i32
    return %c0_i32, %c0_i32_0 : i32, i32
  }
  func.func @transform_3(%arg0: i32) -> (i32, i32) {
    %c0_i32 = arith.constant 0 : i32
    %c0_i32_0 = arith.constant 0 : i32
    %c0_i32_1 = arith.constant 0 : i32
    return %c0_i32, %c0_i32_0 : i32, i32
  }
  func.func @transform_4(%arg0: i32) -> (i32, i32) {
    %c0_i32 = arith.constant 0 : i32
    %c0_i32_0 = arith.constant 0 : i32
    %c0_i32_1 = arith.constant 0 : i32
    return %c0_i32, %c0_i32_0 : i32, i32
  }
  func.func @transform_5(%arg0: i32) -> (i32, i32) {
    %c0_i32 = arith.constant 0 : i32
    %c0_i32_0 = arith.constant 0 : i32
    %c0_i32_1 = arith.constant 0 : i32
    return %c0_i32, %c0_i32_0 : i32, i32
  }
  func.func @transform_6(%arg0: i32) -> (i32, i32) {
    %c0_i32 = arith.constant 0 : i32
    %c0_i32_0 = arith.constant 0 : i32
    %c0_i32_1 = arith.constant 0 : i32
    return %c0_i32, %c0_i32_0 : i32, i32
  }
  func.func @transform_7(%arg0: i32) -> (i32, i32) {
    %c0_i32 = arith.constant 0 : i32
    %c0_i32_0 = arith.constant 0 : i32
    %c0_i32_1 = arith.constant 0 : i32
    return %c0_i32, %c0_i32_0 : i32, i32
  }
  func.func @transform_8(%arg0: i32) -> (i32, i32) {
    %c0_i32 = arith.constant 0 : i32
    %c0_i32_0 = arith.constant 0 : i32
    %c0_i32_1 = arith.constant 0 : i32
    return %c0_i32, %c0_i32_0 : i32, i32
  }
  func.func @transform_9(%arg0: i32) -> (i32, i32) {
    %c0_i32 = arith.constant 0 : i32
    %c0_i32_0 = arith.constant 0 : i32
    %c0_i32_1 = arith.constant 0 : i32
    return %c0_i32, %c0_i32_0 : i32, i32
  }
  func.func @transform_10(%arg0: i32) -> (i32, i32) {
    %c0_i32 = arith.constant 0 : i32
    %c0_i32_0 = arith.constant 0 : i32
    %c0_i32_1 = arith.constant 0 : i32
    return %c0_i32, %c0_i32_0 : i32, i32
  }
  func.func @transform_11(%arg0: i32) -> (i32, i32) {
    %c0_i32 = arith.constant 0 : i32
    %c0_i32_0 = arith.constant 0 : i32
    return %arg0, %c0_i32 : i32, i32
  }
}

</mosaic_0001>

<llo_original>
// kernel: tpu_custom_call.1
$region0: #{tpu_custom_call.1}
  #allocation0 [shape = 'u32[]', space=smem, size = 0x4, offset = 0x4, fixed_abs, tag = 'smem constant byte address 0x4 - core index']
  #allocation1 [shape = 'u32[144,128]{1,0:T(1,128)}', space=vmem, size = 0x12000, scoped, tag = 'internal scratch']
  %s0 = inlined_call_operand.vmem [shape: f32[8,16], index: 0, kind: input, shape index: {}]
  %s1 = inlined_call_operand.hbm [shape: f32[16,128], index: 1, kind: input, shape index: {}]
  %s2 = inlined_call_operand.vmem [shape: f32[1,128], index: 2, kind: input, shape index: {}]
  %s3 = inlined_call_operand.vmem [shape: f32[128,128], index: 3, kind: input, shape index: {}]
  %s4 = inlined_call_operand.hbm [shape: f32[1,128], index: 4, kind: input, shape index: {}]
  %s5 = inlined_call_operand.hbm [shape: f32[128,128], index: 5, kind: input, shape index: {}]
  %s6 = inlined_call_operand.vmem [shape: f32[1,128], index: 6, kind: input, shape index: {}]
  %s7 = inlined_call_operand.hbm [shape: f32[128,128], index: 7, kind: input, shape index: {}]
  %s8 = inlined_call_operand.vmem [shape: f32[1,128], index: 8, kind: input, shape index: {}]
  %s9 = inlined_call_operand.vmem [shape: f32[128,4], index: 9, kind: input, shape index: {}]
  %s10 = inlined_call_operand.vmem [shape: f32[1,4], index: 10, kind: input, shape index: {}]
  %s11 = inlined_call_operand.vmem [shape: f32[8,4], index: 11, kind: output, shape index: {}]
  %s12 = sld [smem:[#allocation0]]
  $region70: #{tpu_custom_call.1} parent=0
    _
  %s14 = ssub.s32 1, %s12
  %s15 = scalar_select 0, %s14, %s12
  $region1: #{tpu_custom_call.1} parent=0
    #allocation2 [shape = 'u8[8192]{0}', space=vmem, size = 0x2000, scoped, tag = 'input window, operand 1, single buffered']
    #allocation3 [shape = 's32[1]{0}', space=sflag, size = 0x4, scoped, tag = 'scoped memory for tpu_custom_call.1']
    #allocation4 [shape = 'u8[512]{0}', space=vmem, size = 0x400, scoped, tag = 'input window, operand 4, single buffered']
    #allocation5 [shape = 's32[1]{0}', space=sflag, size = 0x4, scoped, tag = 'scoped memory for tpu_custom_call.1']
    #allocation6 [shape = 'u8[65536]{0}', space=vmem, size = 0x10000, scoped, tag = 'input window, operand 5, single buffered']
    #allocation7 [shape = 'u8[65536]{0}', space=vmem, size = 0x10000, scoped, tag = 'input window, operand 7, single buffered']
    #allocation8 [shape = 's32[1]{0}', space=sflag, size = 0x4, scoped, tag = 'scoped memory for tpu_custom_call.1']
    %16 = vsyncpa [#allocation3], 0
    %17 = vsyncpa [#allocation5], 0
    %18 = vsyncpa [#allocation8], 0
    // Predicated region
    $region2: #{tpu_custom_call.1} parent=1 // pred_check
      _
    $region3: #{tpu_custom_call.1} parent=1 // pred_check_branch
      %20 = sbr.rel (0) target = $region5
    $region4: #{tpu_custom_call.1} parent=1 // pred_region
      _
    $region5: #{tpu_custom_call.1} parent=1 // pred_fallthru
      _
    // Predicated region
    $region6: #{tpu_custom_call.1} parent=1 // pred_check
      _
    $region7: #{tpu_custom_call.1} parent=1 // pred_check_branch
      %22 = sbr.rel (0) target = $region9
    $region8: #{tpu_custom_call.1} parent=1 // pred_region
      %s24 = ssub.s32 256, 256
      %25 = vsyncadd [#allocation3], %s24
      %s26 = sshll.u32 [#allocation2], 4
      %s27 = int_to_ptr.vmem [resolvable:$true] %s26
      %32 = dma.hbm_to_vmem [thread:$0]  %s1, 256, %s27, [#allocation3], 128, 128, 8
    $region9: #{tpu_custom_call.1} parent=1 // pred_fallthru
      _
    // Predicated region
    $region10: #{tpu_custom_call.1} parent=1 // pred_check
      _
    $region11: #{tpu_custom_call.1} parent=1 // pred_check_branch
      %34 = sbr.rel (0) target = $region13
    $region12: #{tpu_custom_call.1} parent=1 // pred_region
      _
    $region13: #{tpu_custom_call.1} parent=1 // pred_fallthru
      _
    // Predicated region
    $region14: #{tpu_custom_call.1} parent=1 // pred_check
      _
    $region15: #{tpu_custom_call.1} parent=1 // pred_check_branch
      %36 = sbr.rel (0) target = $region17
    $region16: #{tpu_custom_call.1} parent=1 // pred_region
      _
    $region17: #{tpu_custom_call.1} parent=1 // pred_fallthru
      _
    // Predicated region
    $region18: #{tpu_custom_call.1} parent=1 // pred_check
      _
    $region19: #{tpu_custom_call.1} parent=1 // pred_check_branch
      %38 = sbr.rel (0) target = $region21
    $region20: #{tpu_custom_call.1} parent=1 // pred_region
      %s40 = ssub.s32 16, 16
      %41 = vsyncadd [#allocation5], %s40
      %s43 = sshll.u32 [#allocation4], 4
      %s44 = int_to_ptr.vmem [resolvable:$true] %s43
      %46 = dma.hbm_to_vmem [thread:$0]  %s4, 16, %s44, [#allocation5]
    $region21: #{tpu_custom_call.1} parent=1 // pred_fallthru
      _
    // Predicated region
    $region22: #{tpu_custom_call.1} parent=1 // pred_check
      _
    $region23: #{tpu_custom_call.1} parent=1 // pred_check_branch
      %48 = sbr.rel (0) target = $region25
    $region24: #{tpu_custom_call.1} parent=1 // pred_region
      %s50 = ssub.s32 2048, 2048
      %51 = vsyncadd [#allocation5], %s50
      %s52 = sshll.u32 [#allocation6], 4
      %s53 = int_to_ptr.vmem [resolvable:$true] %s52
      %58 = dma.hbm_to_vmem [thread:$0]  %s5, 2048, %s53, [#allocation5], 128, 128, 8
    $region25: #{tpu_custom_call.1} parent=1 // pred_fallthru
      _
    // Predicated region
    $region26: #{tpu_custom_call.1} parent=1 // pred_check
      _
    $region27: #{tpu_custom_call.1} parent=1 // pred_check_branch
      %60 = sbr.rel (0) target = $region29
    $region28: #{tpu_custom_call.1} parent=1 // pred_region
      _
    $region29: #{tpu_custom_call.1} parent=1 // pred_fallthru
      _
    // Predicated region
    $region30: #{tpu_custom_call.1} parent=1 // pred_check
      _
    $region31: #{tpu_custom_call.1} parent=1 // pred_check_branch
      %62 = sbr.rel (0) target = $region33
    $region32: #{tpu_custom_call.1} parent=1 // pred_region
      %s64 = ssub.s32 2048, 2048
      %65 = vsyncadd [#allocation8], %s64
      %s66 = sshll.u32 [#allocation7], 4
      %s67 = int_to_ptr.vmem [resolvable:$true] %s66
      %72 = dma.hbm_to_vmem [thread:$0]  %s7, 2048, %s67, [#allocation8], 128, 128, 8
    $region33: #{tpu_custom_call.1} parent=1 // pred_fallthru
      _
    // Predicated region
    $region34: #{tpu_custom_call.1} parent=1 // pred_check
      _
    $region35: #{tpu_custom_call.1} parent=1 // pred_check_branch
      %74 = sbr.rel (0) target = $region37
    $region36: #{tpu_custom_call.1} parent=1 // pred_region
      _
    $region37: #{tpu_custom_call.1} parent=1 // pred_fallthru
      _
    // Predicated region
    $region38: #{tpu_custom_call.1} parent=1 // pred_check
      _
    $region39: #{tpu_custom_call.1} parent=1 // pred_check_branch
      %76 = sbr.rel (0) target = $region41
    $region40: #{tpu_custom_call.1} parent=1 // pred_region
      _
    $region41: #{tpu_custom_call.1} parent=1 // pred_fallthru
      _
    // Predicated region
    $region42: #{tpu_custom_call.1} parent=1 // pred_check
      _
    $region43: #{tpu_custom_call.1} parent=1 // pred_check_branch
      %78 = sbr.rel (0) target = $region45
    $region44: #{tpu_custom_call.1} parent=1 // pred_region
      _
    $region45: #{tpu_custom_call.1} parent=1 // pred_fallthru
      _
    // Predicated region
    $region46: #{tpu_custom_call.1} parent=1 // pred_check
      _
    $region47: #{tpu_custom_call.1} parent=1 // pred_check_branch
      %80 = sbr.rel (0) target = $region49
    $region48: #{tpu_custom_call.1} parent=1 // pred_region
      %81 = dma.done [#allocation3], 256
    $region49: #{tpu_custom_call.1} parent=1 // pred_fallthru
      _
    // Predicated region
    $region50: #{tpu_custom_call.1} parent=1 // pred_check
      _
    $region51: #{tpu_custom_call.1} parent=1 // pred_check_branch
      %83 = sbr.rel (0) target = $region53
    $region52: #{tpu_custom_call.1} parent=1 // pred_region
      %84 = dma.done [#allocation5], 16
    $region53: #{tpu_custom_call.1} parent=1 // pred_fallthru
      _
    // Predicated region
    $region54: #{tpu_custom_call.1} parent=1 // pred_check
      _
    $region55: #{tpu_custom_call.1} parent=1 // pred_check_branch
      %86 = sbr.rel (0) target = $region57
    $region56: #{tpu_custom_call.1} parent=1 // pred_region
      %87 = dma.done [#allocation5], 2048
    $region57: #{tpu_custom_call.1} parent=1 // pred_fallthru
      _
    // Predicated region
    $region58: #{tpu_custom_call.1} parent=1 // pred_check
      _
    $region59: #{tpu_custom_call.1} parent=1 // pred_check_branch
      %89 = sbr.rel (0) target = $region61
    $region60: #{tpu_custom_call.1} parent=1 // pred_region
      %90 = dma.done [#allocation8], 2048
    $region61: #{tpu_custom_call.1} parent=1 // pred_fallthru
      _
    %v91 = vld [vmem:[%s0] sm:$0xff]
    %v92 = vld [vmem:[#allocation2] sm:$0xff]
    %v93 = vld [vmem:[#allocation2 + $0x8] sm:$0xff]
    %v94 = vld [vmem:[%s2] sm:$0x1]
    %v96 = vlaneseq
    %v97 = vshrl.u32 %v96, 7
    %v98 = vsub.s32 0, %v97
    %v99 = vrot.slane %v94, %v98
    %vm101 = vcmask 130048
    %v103 = vsel %vm101, %v91, 0
    %105 = vmatprep.subr.mxu0 0.0
    %106 = vmatpush1.msra.mxu0 0.0
    %107 = vmatprep.subr.mxu0 0.0
    %108 = vmatpush1.msra.mxu0 0.0
    %109 = vmatprep.subr.mxu0 0.0
    %110 = vmatpush1.msra.mxu0 0.0
    %111 = vmatprep.subr.mxu0 0.0
    %112 = vmatpush1.msra.mxu0 0.0
    %113 = vmatprep.subr.mxu0 0.0
    %114 = vmatpush1.msra.mxu0 0.0
    %115 = vmatprep.subr.mxu0 0.0
    %116 = vmatpush1.msra.mxu0 0.0
    %117 = vmatprep.subr.mxu0 0.0
    %118 = vmatpush1.msra.mxu0 0.0
    %119 = vmatprep.subr.mxu0 0.0
    %120 = vmatpush1.msra.mxu0 0.0
    %121 = vmatprep.subr.mxu0 0.0
    %122 = vmatpush1.msra.mxu0 0.0
    %123 = vmatprep.subr.mxu0 0.0
    %124 = vmatpush1.msra.mxu0 0.0
    %125 = vmatprep.subr.mxu0 0.0
    %126 = vmatpush1.msra.mxu0 0.0
    %127 = vmatprep.subr.mxu0 0.0
    %128 = vmatpush1.msra.mxu0 0.0
    %129 = vmatprep.subr.mxu0 0.0
    %130 = vmatpush1.msra.mxu0 0.0
    %131 = vmatprep.subr.mxu0 0.0
    %132 = vmatpush1.msra.mxu0 0.0
    %133 = vmatprep.subr.mxu0 0.0
    %134 = vmatpush1.msra.mxu0 %v93
    %135 = vmatprep.subr.mxu0 0.0
    %136 = vmatpush1.msra.mxu0 %v92
    %137 = vmatprep.subr.mxu0 0.0
    %138 = vmatpush2.msra.mxu0 0.0
    %139 = vmatprep.subr.mxu0 0.0
    %140 = vmatpush2.msra.mxu0 0.0
    %141 = vmatprep.subr.mxu0 0.0
    %142 = vmatpush2.msra.mxu0 0.0
    %143 = vmatprep.subr.mxu0 0.0
    %144 = vmatpush2.msra.mxu0 0.0
    %145 = vmatprep.subr.mxu0 0.0
    %146 = vmatpush2.msra.mxu0 0.0
    %147 = vmatprep.subr.mxu0 0.0
    %148 = vmatpush2.msra.mxu0 0.0
    %149 = vmatprep.subr.mxu0 0.0
    %150 = vmatpush2.msra.mxu0 0.0
    %151 = vmatprep.subr.mxu0 0.0
    %152 = vmatpush2.msra.mxu0 0.0
    %153 = vmatprep.subr.mxu0 0.0
    %154 = vmatpush2.msra.mxu0 0.0
    %155 = vmatprep.subr.mxu0 0.0
    %156 = vmatpush2.msra.mxu0 0.0
    %157 = vmatprep.subr.mxu0 0.0
    %158 = vmatpush2.msra.mxu0 0.0
    %159 = vmatprep.subr.mxu0 0.0
    %160 = vmatpush2.msra.mxu0 0.0
    %161 = vmatprep.subr.mxu0 0.0
    %162 = vmatpush2.msra.mxu0 0.0
    %163 = vmatprep.subr.mxu0 0.0
    %164 = vmatpush2.msra.mxu0 0.0
    %165 = vmatprep.subr.mxu0 0.0
    %166 = vmatpush2.msra.mxu0 0.0
    %167 = vmatprep.subr.mxu0 0.0
    %168 = vmatpush2.msra.mxu0 0.0
    %169 = vmatprep.mubr.f32.mxu0 0.0
    %170 = vmatmul.mubr.f32.gmra.mxu0 %v103
    %v171 = vpop.f32.mrf.mxu0
    %v172 = vadd.f32 %v99, %v171
    %v173 = vpop.f32.mrf.mxu0
    %174 = vdwg.mxu0
    %v175 = vmax.f32 %v172, 0.0
    %v176 = vld [vmem:[%s3] sm:$0xff]
    %v177 = vld [vmem:[%s3 + $0x8] sm:$0xff]
    %v178 = vld [vmem:[%s3 + $0x10] sm:$0xff]
    %v179 = vld [vmem:[%s3 + $0x18] sm:$0xff]
    %v180 = vld [vmem:[%s3 + $0x20] sm:$0xff]
    %v181 = vld [vmem:[%s3 + $0x28] sm:$0xff]
    %v182 = vld [vmem:[%s3 + $0x30] sm:$0xff]
    %v183 = vld [vmem:[%s3 + $0x38] sm:$0xff]
    %v184 = vld [vmem:[%s3 + $0x40] sm:$0xff]
    %v185 = vld [vmem:[%s3 + $0x48] sm:$0xff]
    %v186 = vld [vmem:[%s3 + $0x50] sm:$0xff]
    %v187 = vld [vmem:[%s3 + $0x58] sm:$0xff]
    %v188 = vld [vmem:[%s3 + $0x60] sm:$0xff]
    %v189 = vld [vmem:[%s3 + $0x68] sm:$0xff]
    %v190 = vld [vmem:[%s3 + $0x70] sm:$0xff]
    %v191 = vld [vmem:[%s3 + $0x78] sm:$0xff]
    %v192 = vld [vmem:[#allocation4] sm:$0x1]
    %v194 = vlaneseq
    %v195 = vshrl.u32 %v194, 7
    %v196 = vsub.s32 0, %v195
    %v197 = vrot.slane %v192, %v196
    %199 = vmatprep.subr.mxu0 0.0
    %200 = vmatpush1.msra.mxu0 %v191
    %201 = vmatprep.subr.mxu0 0.0
    %202 = vmatpush1.msra.mxu0 %v190
    %203 = vmatprep.subr.mxu0 0.0
    %204 = vmatpush1.msra.mxu0 %v189
    %205 = vmatprep.subr.mxu0 0.0
    %206 = vmatpush1.msra.mxu0 %v188
    %207 = vmatprep.subr.mxu0 0.0
    %208 = vmatpush1.msra.mxu0 %v187
    %209 = vmatprep.subr.mxu0 0.0
    %210 = vmatpush1.msra.mxu0 %v186
    %211 = vmatprep.subr.mxu0 0.0
    %212 = vmatpush1.msra.mxu0 %v185
    %213 = vmatprep.subr.mxu0 0.0
    %214 = vmatpush1.msra.mxu0 %v184
    %215 = vmatprep.subr.mxu0 0.0
    %216 = vmatpush1.msra.mxu0 %v183
    %217 = vmatprep.subr.mxu0 0.0
    %218 = vmatpush1.msra.mxu0 %v182
    %219 = vmatprep.subr.mxu0 0.0
    %220 = vmatpush1.msra.mxu0 %v181
    %221 = vmatprep.subr.mxu0 0.0
    %222 = vmatpush1.msra.mxu0 %v180
    %223 = vmatprep.subr.mxu0 0.0
    %224 = vmatpush1.msra.mxu0 %v179
    %225 = vmatprep.subr.mxu0 0.0
    %226 = vmatpush1.msra.mxu0 %v178
    %227 = vmatprep.subr.mxu0 0.0
    %228 = vmatpush1.msra.mxu0 %v177
    %229 = vmatprep.subr.mxu0 0.0
    %230 = vmatpush1.msra.mxu0 %v176
    %231 = vmatprep.subr.mxu0 0.0
    %232 = vmatpush2.msra.mxu0 0.0
    %233 = vmatprep.subr.mxu0 0.0
    %234 = vmatpush2.msra.mxu0 0.0
    %235 = vmatprep.subr.mxu0 0.0
    %236 = vmatpush2.msra.mxu0 0.0
    %237 = vmatprep.subr.mxu0 0.0
    %238 = vmatpush2.msra.mxu0 0.0
    %239 = vmatprep.subr.mxu0 0.0
    %240 = vmatpush2.msra.mxu0 0.0
    %241 = vmatprep.subr.mxu0 0.0
    %242 = vmatpush2.msra.mxu0 0.0
    %243 = vmatprep.subr.mxu0 0.0
    %244 = vmatpush2.msra.mxu0 0.0
    %245 = vmatprep.subr.mxu0 0.0
    %246 = vmatpush2.msra.mxu0 0.0
    %247 = vmatprep.subr.mxu0 0.0
    %248 = vmatpush2.msra.mxu0 0.0
    %249 = vmatprep.subr.mxu0 0.0
    %250 = vmatpush2.msra.mxu0 0.0
    %251 = vmatprep.subr.mxu0 0.0
    %252 = vmatpush2.msra.mxu0 0.0
    %253 = vmatprep.subr.mxu0 0.0
    %254 = vmatpush2.msra.mxu0 0.0
    %255 = vmatprep.subr.mxu0 0.0
    %256 = vmatpush2.msra.mxu0 0.0
    %257 = vmatprep.subr.mxu0 0.0
    %258 = vmatpush2.msra.mxu0 0.0
    %259 = vmatprep.subr.mxu0 0.0
    %260 = vmatpush2.msra.mxu0 0.0
    %261 = vmatprep.subr.mxu0 0.0
    %262 = vmatpush2.msra.mxu0 0.0
    %263 = vmatprep.mubr.f32.mxu0 0.0
    %264 = vmatmul.mubr.f32.gmra.mxu0 %v175
    %v265 = vpop.f32.mrf.mxu0
    %v266 = vadd.f32 %v197, %v265
    %v267 = vpop.f32.mrf.mxu0
    %268 = vdwg.mxu0
    %v269 = vmax.f32 %v266, 0.0
    %v270 = vld [vmem:[#allocation6] sm:$0xff]
    %v271 = vld [vmem:[#allocation6 + $0x8] sm:$0xff]
    %v272 = vld [vmem:[#allocation6 + $0x10] sm:$0xff]
    %v273 = vld [vmem:[#allocation6 + $0x18] sm:$0xff]
    %v274 = vld [vmem:[#allocation6 + $0x20] sm:$0xff]
    %v275 = vld [vmem:[#allocation6 + $0x28] sm:$0xff]
    %v276 = vld [vmem:[#allocation6 + $0x30] sm:$0xff]
    %v277 = vld [vmem:[#allocation6 + $0x38] sm:$0xff]
    %v278 = vld [vmem:[#allocation6 + $0x40] sm:$0xff]
    %v279 = vld [vmem:[#allocation6 + $0x48] sm:$0xff]
    %v280 = vld [vmem:[#allocation6 + $0x50] sm:$0xff]
    %v281 = vld [vmem:[#allocation6 + $0x58] sm:$0xff]
    %v282 = vld [vmem:[#allocation6 + $0x60] sm:$0xff]
    %v283 = vld [vmem:[#allocation6 + $0x68] sm:$0xff]
    %v284 = vld [vmem:[#allocation6 + $0x70] sm:$0xff]
    %v285 = vld [vmem:[#allocation6 + $0x78] sm:$0xff]
    %v286 = vld [vmem:[%s6] sm:$0x1]
    %v288 = vlaneseq
    %v289 = vshrl.u32 %v288, 7
    %v290 = vsub.s32 0, %v289
    %v291 = vrot.slane %v286, %v290
    %293 = vmatprep.subr.mxu0 0.0
    %294 = vmatpush1.msra.mxu0 %v285
    %295 = vmatprep.subr.mxu0 0.0
    %296 = vmatpush1.msra.mxu0 %v284
    %297 = vmatprep.subr.mxu0 0.0
    %298 = vmatpush1.msra.mxu0 %v283
    %299 = vmatprep.subr.mxu0 0.0
    %300 = vmatpush1.msra.mxu0 %v282
    %301 = vmatprep.subr.mxu0 0.0
    %302 = vmatpush1.msra.mxu0 %v281
    %303 = vmatprep.subr.mxu0 0.0
    %304 = vmatpush1.msra.mxu0 %v280
    %305 = vmatprep.subr.mxu0 0.0
    %306 = vmatpush1.msra.mxu0 %v279
    %307 = vmatprep.subr.mxu0 0.0
    %308 = vmatpush1.msra.mxu0 %v278
    %309 = vmatprep.subr.mxu0 0.0
    %310 = vmatpush1.msra.mxu0 %v277
    %311 = vmatprep.subr.mxu0 0.0
    %312 = vmatpush1.msra.mxu0 %v276
    %313 = vmatprep.subr.mxu0 0.0
    %314 = vmatpush1.msra.mxu0 %v275
    %315 = vmatprep.subr.mxu0 0.0
    %316 = vmatpush1.msra.mxu0 %v274
    %317 = vmatprep.subr.mxu0 0.0
    %318 = vmatpush1.msra.mxu0 %v273
    %319 = vmatprep.subr.mxu0 0.0
    %320 = vmatpush1.msra.mxu0 %v272
    %321 = vmatprep.subr.mxu0 0.0
    %322 = vmatpush1.msra.mxu0 %v271
    %323 = vmatprep.subr.mxu0 0.0
    %324 = vmatpush1.msra.mxu0 %v270
    %325 = vmatprep.subr.mxu0 0.0
    %326 = vmatpush2.msra.mxu0 0.0
    %327 = vmatprep.subr.mxu0 0.0
    %328 = vmatpush2.msra.mxu0 0.0
    %329 = vmatprep.subr.mxu0 0.0
    %330 = vmatpush2.msra.mxu0 0.0
    %331 = vmatprep.subr.mxu0 0.0
    %332 = vmatpush2.msra.mxu0 0.0
    %333 = vmatprep.subr.mxu0 0.0
    %334 = vmatpush2.msra.mxu0 0.0
    %335 = vmatprep.subr.mxu0 0.0
    %336 = vmatpush2.msra.mxu0 0.0
    %337 = vmatprep.subr.mxu0 0.0
    %338 = vmatpush2.msra.mxu0 0.0
    %339 = vmatprep.subr.mxu0 0.0
    %340 = vmatpush2.msra.mxu0 0.0
    %341 = vmatprep.subr.mxu0 0.0
    %342 = vmatpush2.msra.mxu0 0.0
    %343 = vmatprep.subr.mxu0 0.0
    %344 = vmatpush2.msra.mxu0 0.0
    %345 = vmatprep.subr.mxu0 0.0
    %346 = vmatpush2.msra.mxu0 0.0
    %347 = vmatprep.subr.mxu0 0.0
    %348 = vmatpush2.msra.mxu0 0.0
    %349 = vmatprep.subr.mxu0 0.0
    %350 = vmatpush2.msra.mxu0 0.0
    %351 = vmatprep.subr.mxu0 0.0
    %352 = vmatpush2.msra.mxu0 0.0
    %353 = vmatprep.subr.mxu0 0.0
    %354 = vmatpush2.msra.mxu0 0.0
    %355 = vmatprep.subr.mxu0 0.0
    %356 = vmatpush2.msra.mxu0 0.0
    %357 = vmatprep.mubr.f32.mxu0 0.0
    %358 = vmatmul.mubr.f32.gmra.mxu0 %v269
    %v359 = vpop.f32.mrf.mxu0
    %v360 = vadd.f32 %v291, %v359
    %v361 = vpop.f32.mrf.mxu0
    %362 = vdwg.mxu0
    %v363 = vmax.f32 %v360, 0.0
    %v364 = vld [vmem:[#allocation7] sm:$0xff]
    %v365 = vld [vmem:[#allocation7 + $0x8] sm:$0xff]
    %v366 = vld [vmem:[#allocation7 + $0x10] sm:$0xff]
    %v367 = vld [vmem:[#allocation7 + $0x18] sm:$0xff]
    %v368 = vld [vmem:[#allocation7 + $0x20] sm:$0xff]
    %v369 = vld [vmem:[#allocation7 + $0x28] sm:$0xff]
    %v370 = vld [vmem:[#allocation7 + $0x30] sm:$0xff]
    %v371 = vld [vmem:[#allocation7 + $0x38] sm:$0xff]
    %v372 = vld [vmem:[#allocation7 + $0x40] sm:$0xff]
    %v373 = vld [vmem:[#allocation7 + $0x48] sm:$0xff]
    %v374 = vld [vmem:[#allocation7 + $0x50] sm:$0xff]
    %v375 = vld [vmem:[#allocation7 + $0x58] sm:$0xff]
    %v376 = vld [vmem:[#allocation7 + $0x60] sm:$0xff]
    %v377 = vld [vmem:[#allocation7 + $0x68] sm:$0xff]
    %v378 = vld [vmem:[#allocation7 + $0x70] sm:$0xff]
    %v379 = vld [vmem:[#allocation7 + $0x78] sm:$0xff]
    %v380 = vld [vmem:[%s8] sm:$0x1]
    %v382 = vlaneseq
    %v383 = vshrl.u32 %v382, 7
    %v384 = vsub.s32 0, %v383
    %v385 = vrot.slane %v380, %v384
    %387 = vmatprep.subr.mxu0 0.0
    %388 = vmatpush1.msra.mxu0 %v379
    %389 = vmatprep.subr.mxu0 0.0
    %390 = vmatpush1.msra.mxu0 %v378
    %391 = vmatprep.subr.mxu0 0.0
    %392 = vmatpush1.msra.mxu0 %v377
    %393 = vmatprep.subr.mxu0 0.0
    %394 = vmatpush1.msra.mxu0 %v376
    %395 = vmatprep.subr.mxu0 0.0
    %396 = vmatpush1.msra.mxu0 %v375
    %397 = vmatprep.subr.mxu0 0.0
    %398 = vmatpush1.msra.mxu0 %v374
    %399 = vmatprep.subr.mxu0 0.0
    %400 = vmatpush1.msra.mxu0 %v373
    %401 = vmatprep.subr.mxu0 0.0
    %402 = vmatpush1.msra.mxu0 %v372
    %403 = vmatprep.subr.mxu0 0.0
    %404 = vmatpush1.msra.mxu0 %v371
    %405 = vmatprep.subr.mxu0 0.0
    %406 = vmatpush1.msra.mxu0 %v370
    %407 = vmatprep.subr.mxu0 0.0
    %408 = vmatpush1.msra.mxu0 %v369
    %409 = vmatprep.subr.mxu0 0.0
    %410 = vmatpush1.msra.mxu0 %v368
    %411 = vmatprep.subr.mxu0 0.0
    %412 = vmatpush1.msra.mxu0 %v367
    %413 = vmatprep.subr.mxu0 0.0
    %414 = vmatpush1.msra.mxu0 %v366
    %415 = vmatprep.subr.mxu0 0.0
    %416 = vmatpush1.msra.mxu0 %v365
    %417 = vmatprep.subr.mxu0 0.0
    %418 = vmatpush1.msra.mxu0 %v364
    %419 = vmatprep.subr.mxu0 0.0
    %420 = vmatpush2.msra.mxu0 0.0
    %421 = vmatprep.subr.mxu0 0.0
    %422 = vmatpush2.msra.mxu0 0.0
    %423 = vmatprep.subr.mxu0 0.0
    %424 = vmatpush2.msra.mxu0 0.0
    %425 = vmatprep.subr.mxu0 0.0
    %426 = vmatpush2.msra.mxu0 0.0
    %427 = vmatprep.subr.mxu0 0.0
    %428 = vmatpush2.msra.mxu0 0.0
    %429 = vmatprep.subr.mxu0 0.0
    %430 = vmatpush2.msra.mxu0 0.0
    %431 = vmatprep.subr.mxu0 0.0
    %432 = vmatpush2.msra.mxu0 0.0
    %433 = vmatprep.subr.mxu0 0.0
    %434 = vmatpush2.msra.mxu0 0.0
    %435 = vmatprep.subr.mxu0 0.0
    %436 = vmatpush2.msra.mxu0 0.0
    %437 = vmatprep.subr.mxu0 0.0
    %438 = vmatpush2.msra.mxu0 0.0
    %439 = vmatprep.subr.mxu0 0.0
    %440 = vmatpush2.msra.mxu0 0.0
    %441 = vmatprep.subr.mxu0 0.0
    %442 = vmatpush2.msra.mxu0 0.0
    %443 = vmatprep.subr.mxu0 0.0
    %444 = vmatpush2.msra.mxu0 0.0
    %445 = vmatprep.subr.mxu0 0.0
    %446 = vmatpush2.msra.mxu0 0.0
    %447 = vmatprep.subr.mxu0 0.0
    %448 = vmatpush2.msra.mxu0 0.0
    %449 = vmatprep.subr.mxu0 0.0
    %450 = vmatpush2.msra.mxu0 0.0
    %451 = vmatprep.mubr.f32.mxu0 0.0
    %452 = vmatmul.mubr.f32.gmra.mxu0 %v363
    %v453 = vpop.f32.mrf.mxu0
    %v454 = vadd.f32 %v385, %v453
    %v455 = vpop.f32.mrf.mxu0
    %456 = vdwg.mxu0
    %v457 = vmax.f32 %v454, 0.0
    %v458 = vld [vmem:[%s9] sm:$0xff]
    %v459 = vld [vmem:[%s9 + $0x8] sm:$0xff]
    %v460 = vld [vmem:[%s9 + $0x10] sm:$0xff]
    %v461 = vld [vmem:[%s9 + $0x18] sm:$0xff]
    %v462 = vld [vmem:[%s9 + $0x20] sm:$0xff]
    %v463 = vld [vmem:[%s9 + $0x28] sm:$0xff]
    %v464 = vld [vmem:[%s9 + $0x30] sm:$0xff]
    %v465 = vld [vmem:[%s9 + $0x38] sm:$0xff]
    %v466 = vld [vmem:[%s9 + $0x40] sm:$0xff]
    %v467 = vld [vmem:[%s9 + $0x48] sm:$0xff]
    %v468 = vld [vmem:[%s9 + $0x50] sm:$0xff]
    %v469 = vld [vmem:[%s9 + $0x58] sm:$0xff]
    %v470 = vld [vmem:[%s9 + $0x60] sm:$0xff]
    %v471 = vld [vmem:[%s9 + $0x68] sm:$0xff]
    %v472 = vld [vmem:[%s9 + $0x70] sm:$0xff]
    %v473 = vld [vmem:[%s9 + $0x78] sm:$0xff]
    %v474 = vld [vmem:[%s10] sm:$0x1]
    %v476 = vlaneseq
    %v477 = vshrl.u32 %v476, 7
    %v478 = vsub.s32 0, %v477
    %v479 = vrot.slane %v474, %v478
    %481 = vmatprep.subr.mxu0 0.0
    %482 = vmatpush1.msra.mxu0 %v473
    %483 = vmatprep.subr.mxu0 0.0
    %484 = vmatpush1.msra.mxu0 %v472
    %485 = vmatprep.subr.mxu0 0.0
    %486 = vmatpush1.msra.mxu0 %v471
    %487 = vmatprep.subr.mxu0 0.0
    %488 = vmatpush1.msra.mxu0 %v470
    %489 = vmatprep.subr.mxu0 0.0
    %490 = vmatpush1.msra.mxu0 %v469
    %491 = vmatprep.subr.mxu0 0.0
    %492 = vmatpush1.msra.mxu0 %v468
    %493 = vmatprep.subr.mxu0 0.0
    %494 = vmatpush1.msra.mxu0 %v467
    %495 = vmatprep.subr.mxu0 0.0
    %496 = vmatpush1.msra.mxu0 %v466
    %497 = vmatprep.subr.mxu0 0.0
    %498 = vmatpush1.msra.mxu0 %v465
    %499 = vmatprep.subr.mxu0 0.0
    %500 = vmatpush1.msra.mxu0 %v464
    %501 = vmatprep.subr.mxu0 0.0
    %502 = vmatpush1.msra.mxu0 %v463
    %503 = vmatprep.subr.mxu0 0.0
    %504 = vmatpush1.msra.mxu0 %v462
    %505 = vmatprep.subr.mxu0 0.0
    %506 = vmatpush1.msra.mxu0 %v461
    %507 = vmatprep.subr.mxu0 0.0
    %508 = vmatpush1.msra.mxu0 %v460
    %509 = vmatprep.subr.mxu0 0.0
    %510 = vmatpush1.msra.mxu0 %v459
    %511 = vmatprep.subr.mxu0 0.0
    %512 = vmatpush1.msra.mxu0 %v458
    %513 = vmatprep.subr.mxu0 0.0
    %514 = vmatpush2.msra.mxu0 0.0
    %515 = vmatprep.subr.mxu0 0.0
    %516 = vmatpush2.msra.mxu0 0.0
    %517 = vmatprep.subr.mxu0 0.0
    %518 = vmatpush2.msra.mxu0 0.0
    %519 = vmatprep.subr.mxu0 0.0
    %520 = vmatpush2.msra.mxu0 0.0
    %521 = vmatprep.subr.mxu0 0.0
    %522 = vmatpush2.msra.mxu0 0.0
    %523 = vmatprep.subr.mxu0 0.0
    %524 = vmatpush2.msra.mxu0 0.0
    %525 = vmatprep.subr.mxu0 0.0
    %526 = vmatpush2.msra.mxu0 0.0
    %527 = vmatprep.subr.mxu0 0.0
    %528 = vmatpush2.msra.mxu0 0.0
    %529 = vmatprep.subr.mxu0 0.0
    %530 = vmatpush2.msra.mxu0 0.0
    %531 = vmatprep.subr.mxu0 0.0
    %532 = vmatpush2.msra.mxu0 0.0
    %533 = vmatprep.subr.mxu0 0.0
    %534 = vmatpush2.msra.mxu0 0.0
    %535 = vmatprep.subr.mxu0 0.0
    %536 = vmatpush2.msra.mxu0 0.0
    %537 = vmatprep.subr.mxu0 0.0
    %538 = vmatpush2.msra.mxu0 0.0
    %539 = vmatprep.subr.mxu0 0.0
    %540 = vmatpush2.msra.mxu0 0.0
    %541 = vmatprep.subr.mxu0 0.0
    %542 = vmatpush2.msra.mxu0 0.0
    %543 = vmatprep.subr.mxu0 0.0
    %544 = vmatpush2.msra.mxu0 0.0
    %545 = vmatprep.mubr.f32.mxu0 0.0
    %546 = vmatmul.mubr.f32.gmra.mxu0 %v457
    %v547 = vpop.f32.mrf.mxu0
    %v548 = vadd.f32 %v479, %v547
    %v549 = vpop.f32.mrf.mxu0
    %550 = vdwg.mxu0
    %vm551 = vcmask 31744
    %552 = vst.msk [vmem:[%s11] sm:$0xff] %vm551, %v548
    // Predicated region
    $region62: #{tpu_custom_call.1} parent=1 // pred_check
      _
    $region63: #{tpu_custom_call.1} parent=1 // pred_check_branch
      %554 = sbr.rel (0) target = $region65
    $region64: #{tpu_custom_call.1} parent=1 // pred_region
      _
    $region65: #{tpu_custom_call.1} parent=1 // pred_fallthru
      _
    // Predicated region
    $region66: #{tpu_custom_call.1} parent=1 // pred_check
      _
    $region67: #{tpu_custom_call.1} parent=1 // pred_check_branch
      %556 = sbr.rel (0) target = $region69
    $region68: #{tpu_custom_call.1} parent=1 // pred_region
      _
    $region69: #{tpu_custom_call.1} parent=1 // pred_fallthru
      _
    %557 = vsyncpa [#allocation3], 1
    %558 = vsyncpa [#allocation5], 1
    %559 = vsyncpa [#allocation8], 1

</llo_original>
